<compile_context>
chip_gen: v7x
topology: tpu7x:2x2x1
jax: 0.10.0
libtpu: 0.0.40
codegen_flags: <defaults>
</compile_context>

<pallas_src>
import numpy as np

import jax
import jax.numpy as jnp
from jax import lax
from jax.experimental import pallas as pl
from jax.experimental.pallas import tpu as pltpu


_VMEM_LIMIT = 64 * 1024 * 1024  # ceiling only; chosen tiles use far less (fits v7x 64 MiB)


def _pick_tile(n, max_tile):
    """Largest divisor of n that is <= max_tile and a multiple of 8, else n (full dim)."""
    if n <= max_tile:
        return n
    for t in range(max_tile, 7, -1):
        if n % t == 0 and t % 8 == 0:
            return t
    return n


# ---------------------------------------------------------------------------
# Kernel 1/3: full-width linear  y = x @ W + b   (row-tiled over the grid)
# ---------------------------------------------------------------------------
def _linear_kernel(x_ref, w_ref, b_ref, o_ref):
    acc = jnp.dot(x_ref[...], w_ref[...], preferred_element_type=jnp.float32)
    o_ref[...] = (acc + b_ref[...]).astype(o_ref.dtype)


def _linear(x2d, w, b, out_dtype, *, tm_max=512):
    M, D = x2d.shape
    N = w.shape[1]
    tm = _pick_tile(M, tm_max)
    out_isz = np.dtype(out_dtype).itemsize
    cost = pl.CostEstimate(
        flops=int(2 * M * D * N),
        transcendentals=0,
        bytes_accessed=int(M * D * x2d.dtype.itemsize + D * N * w.dtype.itemsize
                           + b.size * 4 + M * N * out_isz))
    return pl.pallas_call(
        _linear_kernel,
        out_shape=jax.ShapeDtypeStruct((M, N), out_dtype),
        grid=(M // tm,),
        in_specs=[pl.BlockSpec((tm, D), lambda i: (i, 0)),
                  pl.BlockSpec((D, N), lambda i: (0, 0)),
                  pl.BlockSpec((1, N), lambda i: (0, 0))],
        out_specs=pl.BlockSpec((tm, N), lambda i: (i, 0)),
        compiler_params=pltpu.CompilerParams(
            dimension_semantics=("parallel",),
            vmem_limit_bytes=_VMEM_LIMIT),
        cost_estimate=cost,
    )(x2d, w, b)


# ---------------------------------------------------------------------------
# Kernel 2/3: attention core, one (batch, head, q-tile) block per grid step.
# q is pre-scaled by 1/d_k (folded into the Q projection weights).
# ---------------------------------------------------------------------------
def _attn_kernel(q_ref, k_ref, v_ref, o_ref, p_ref):
    q = q_ref[...]                                   # (tq, dq) bf16, already * 1/d_k
    k = k_ref[...]                                   # (Sk, dq) bf16
    v = v_ref[...]                                   # (Sk, dq) bf16

    # scores = q @ k^T  (contraction over dq), f32 accumulation on the MXU
    s = lax.dot_general(q, k, (((1,), (1,)), ((), ())),
                        preferred_element_type=jnp.float32)      # (tq, Sk)

    # softmax in f32; keep a single live (tq, Sk) temporary; divide on the EUP
    s = s - jnp.max(s, axis=-1, keepdims=True)
    p = jnp.exp(s)
    # NOTE: approx reciprocal -> rows sum to 1 only to ~1e-3 relative (perf trade).
    p = p * pl.reciprocal(jnp.sum(p, axis=-1, keepdims=True), approx=True)

    p_ref[...] = p.astype(p_ref.dtype)               # (tq, Sk) probs, Sk lane-dense
    o_ref[...] = jnp.dot(p.astype(v.dtype), v,
                         preferred_element_type=jnp.float32).astype(o_ref.dtype)


def _attention_core(pq, pk, pv, probs_dtype=jnp.float32, *, tq_max=256):
    B, H, Sq, dq = pq.shape
    Sk = pk.shape[2]
    tq = _pick_tile(Sq, tq_max)
    probs_isz = np.dtype(probs_dtype).itemsize
    cost = pl.CostEstimate(
        flops=int(4 * B * H * Sq * Sk * dq),
        transcendentals=int(B * H * Sq * Sk),
        bytes_accessed=int((pq.size + pk.size + pv.size) * 2
                           + B * H * Sq * Sk * probs_isz + B * H * Sq * dq * 2))
    return pl.pallas_call(
        _attn_kernel,
        out_shape=(jax.ShapeDtypeStruct((B, H, Sq, dq), jnp.bfloat16),
                   jax.ShapeDtypeStruct((B, H, Sq, Sk), probs_dtype)),
        grid=(B, H, Sq // tq),
        in_specs=[pl.BlockSpec((None, None, tq, dq), lambda b, h, q: (b, h, q, 0)),
                  pl.BlockSpec((None, None, Sk, dq), lambda b, h, q: (b, h, 0, 0)),
                  pl.BlockSpec((None, None, Sk, dq), lambda b, h, q: (b, h, 0, 0))],
        out_specs=(pl.BlockSpec((None, None, tq, dq), lambda b, h, q: (b, h, q, 0)),
                   pl.BlockSpec((None, None, tq, Sk), lambda b, h, q: (b, h, q, 0))),
        compiler_params=pltpu.CompilerParams(
            dimension_semantics=("parallel", "parallel", "parallel"),
            vmem_limit_bytes=_VMEM_LIMIT),
        cost_estimate=cost,
    )(pq, pk, pv)


# ---------------------------------------------------------------------------
# Wrapper: projections -> attention core -> output projection.
# All head splitting/concatenation is free XLA reshape/transpose here.
# ---------------------------------------------------------------------------
def multi_head_attention_pallas(Q, K, V, params, num_heads):
    B, Sq, D = Q.shape
    Sk = K.shape[1]
    H = num_heads
    dq = D // H
    inv_dk = 1.0 / float(dq)   # PyTorch divides scores by d_k (not sqrt(d_k))

    # bf16 matmul operands prepared once (halves DMA bytes; biases stay f32).
    q2 = Q.reshape(B * Sq, D).astype(jnp.bfloat16)
    k2 = K.reshape(B * Sk, D).astype(jnp.bfloat16)
    v2 = V.reshape(B * Sk, D).astype(jnp.bfloat16)

    # Fold the 1/d_k score scale into the Q projection weights/bias.
    wq = (params["w_q"] * inv_dk).astype(jnp.bfloat16)
    bq = (params["b_q"] * inv_dk).astype(jnp.float32).reshape(1, D)
    wk = params["w_k"].astype(jnp.bfloat16)
    bk = params["b_k"].astype(jnp.float32).reshape(1, D)
    wv = params["w_v"].astype(jnp.bfloat16)
    bv = params["b_v"].astype(jnp.float32).reshape(1, D)
    wo = params["w_o"].astype(jnp.bfloat16)
    bo = params["b_o"].astype(jnp.float32).reshape(1, D)

    # Full-width (M, D) @ (D, D) projections (one MXU-filling matmul each).
    pQ = _linear(q2, wq, bq, jnp.bfloat16)
    pK = _linear(k2, wk, bk, jnp.bfloat16)
    pV = _linear(v2, wv, bv, jnp.bfloat16)

    # Head-major layout for the attention core (pure XLA reshape/transpose).
    pQh = pQ.reshape(B, Sq, H, dq).transpose(0, 2, 1, 3)
    pKh = pK.reshape(B, Sk, H, dq).transpose(0, 2, 1, 3)
    pVh = pV.reshape(B, Sk, H, dq).transpose(0, 2, 1, 3)

    # TODO(synk): optional boolean attention mask (masked_fill -inf) not wired in;
    # this matches the module's forward with mask=None.
    head_out, probs = _attention_core(pQh, pKh, pVh, jnp.float32)

    # Lane-concatenate heads (XLA), then one full-width (M, D) @ (D, D) output proj.
    cat = head_out.transpose(0, 2, 1, 3).reshape(B * Sq, D)
    out = _linear(cat, wo, bo, jnp.float32).reshape(B, Sq, D)

    return out, probs   # probs already in module order (B, H, Sq, Sk)


# ---------------------------------------------------------------------------
# Pure-JAX reference (mirrors the PyTorch forward exactly, mask=None).
# ---------------------------------------------------------------------------
def multi_head_attention_ref(Q, K, V, params, num_heads):
    B, Sq, D = Q.shape
    Sk = K.shape[1]
    H = num_heads
    dq = D // H
    pQ = Q @ params["w_q"] + params["b_q"]
    pK = K @ params["w_k"] + params["b_k"]
    pV = V @ params["w_v"] + params["b_v"]
    pQ = pQ.reshape(B, Sq, H, dq).transpose(0, 2, 1, 3)
    pK = pK.reshape(B, Sk, H, dq).transpose(0, 2, 1, 3)
    pV = pV.reshape(B, Sk, H, dq).transpose(0, 2, 1, 3)
    attn = jnp.einsum('bhqd,bhkd->bhqk', pQ, pK) / dq        # divide by d_k
    attn = jax.nn.softmax(attn, axis=-1)
    out = jnp.einsum('bhqk,bhkd->bhqd', attn, pV)
    out = out.transpose(0, 2, 1, 3).reshape(B, Sq, D)
    out = out @ params["w_o"] + params["b_o"]
    return out, attn


# ---------------------------------------------------------------------------
# Deterministic parameter construction (weights stored as (in, out): y = x@W+b).
# ---------------------------------------------------------------------------
def make_params(key, d_model):
    ks = jax.random.split(key, 8)
    s = 0.1
    return {
        "w_q": s * jax.random.normal(ks[0], (d_model, d_model), jnp.float32),
        "b_q": s * jax.random.normal(ks[1], (d_model,), jnp.float32),
        "w_k": s * jax.random.normal(ks[2], (d_model, d_model), jnp.float32),
        "b_k": s * jax.random.normal(ks[3], (d_model,), jnp.float32),
        "w_v": s * jax.random.normal(ks[4], (d_model, d_model), jnp.float32),
        "b_v": s * jax.random.normal(ks[5], (d_model,), jnp.float32),
        "w_o": s * jax.random.normal(ks[6], (d_model, d_model), jnp.float32),
        "b_o": s * jax.random.normal(ks[7], (d_model,), jnp.float32),
    }


if __name__ == "__main__":
    d_model = 32
    h = 4          # heads
    B = 2          # batch
    Sq = 8         # query sequence length
    Sk = 8         # key/value sequence length

    root = jax.random.PRNGKey(0)
    k_q, k_k, k_v, k_p = jax.random.split(root, 4)
    Q = jax.random.normal(k_q, (B, Sq, d_model), jnp.float32)
    K = jax.random.normal(k_k, (B, Sk, d_model), jnp.float32)
    V = jax.random.normal(k_v, (B, Sk, d_model), jnp.float32)
    params = make_params(k_p, d_model)

    out, attn = multi_head_attention_pallas(Q, K, V, params, h)
    out = jax.block_until_ready(out)
    attn = jax.block_until_ready(attn)

    out_ref, attn_ref = multi_head_attention_ref(Q, K, V, params, h)
    out_ref = jax.block_until_ready(out_ref)
    attn_ref = jax.block_until_ready(attn_ref)

    assert out.shape == (B, Sq, d_model)
    assert attn.shape == (B, h, Sq, Sk)
    assert jnp.allclose(out, out_ref, rtol=2e-2, atol=2e-2), (
        f"out max abs err {jnp.max(jnp.abs(out - out_ref))}")
    assert jnp.allclose(attn, attn_ref, rtol=2e-2, atol=2e-2), (
        f"attn max abs err {jnp.max(jnp.abs(attn - attn_ref))}")

    print("KERNEL_OK")
</pallas_src>

<mosaic_0001>
module attributes {stable_mosaic.version = 11 : i64} {
  func.func @_linear_kernel(%arg0: i32, %arg1: memref<16x32xbf16, #tpu.memory_space<vmem>>, %arg2: memref<32x32xbf16, #tpu.memory_space<vmem>>, %arg3: memref<1x32xf32, #tpu.memory_space<vmem>>, %arg4: memref<16x32xbf16, #tpu.memory_space<vmem>>) attributes {dimension_semantics = [#tpu.dimension_semantics<parallel>], iteration_bounds = array<i64: 1>, scalar_prefetch = 0 : i64, scratch_operands = 0 : i64, tpu.core_type = #tpu.core_type<tc>, window_params = [{transform_indices = @transform_0, window_bounds = array<i64: 16, 32>}, {pipeline_mode = #tpu.pipeline_mode<synchronous>, transform_indices = @transform_1, window_bounds = array<i64: 32, 32>}, {pipeline_mode = #tpu.pipeline_mode<synchronous>, transform_indices = @transform_2, window_bounds = array<i64: 1, 32>}, {transform_indices = @transform_3, window_bounds = array<i64: 16, 32>}]} {
    %c0 = arith.constant 0 : index
    %c0_0 = arith.constant 0 : index
    %0 = vector.load %arg1[%c0, %c0_0] : memref<16x32xbf16, #tpu.memory_space<vmem>>, vector<16x32xbf16>
    %c0_1 = arith.constant 0 : index
    %c0_2 = arith.constant 0 : index
    %1 = vector.load %arg2[%c0_1, %c0_2] : memref<32x32xbf16, #tpu.memory_space<vmem>>, vector<32x32xbf16>
    %cst = arith.constant dense<0.000000e+00> : vector<16x32xf32>
    %2 = tpu.matmul %0, %1, %cst {dimension_numbers = #tpu.dot_dimension_numbers<[1], [0], [0], [1], [0, 0, 1, 1], [], []>} : vector<16x32xbf16>, vector<32x32xbf16>, vector<16x32xf32> -> vector<16x32xf32>
    %c0_3 = arith.constant 0 : index
    %c0_4 = arith.constant 0 : index
    %3 = vector.load %arg3[%c0_3, %c0_4] : memref<1x32xf32, #tpu.memory_space<vmem>>, vector<1x32xf32>
    %4 = vector.broadcast %3 : vector<1x32xf32> to vector<16x32xf32>
    %5 = arith.addf %2, %4 : vector<16x32xf32>
    %6 = arith.truncf %5 : vector<16x32xf32> to vector<16x32xbf16>
    %c0_5 = arith.constant 0 : index
    %c0_6 = arith.constant 0 : index
    %7 = vector.load %arg4[%c0_5, %c0_6] : memref<16x32xbf16, #tpu.memory_space<vmem>>, vector<16x32xbf16>
    tpu.vector_store %arg4[%c0_5, %c0_6], %6 {strides = array<i32>} : memref<16x32xbf16, #tpu.memory_space<vmem>>, vector<16x32xbf16>,
    return
  }
  func.func @transform_0(%arg0: i32) -> (i32, i32) {
    %c0_i32 = arith.constant 0 : i32
    %c0_i32_0 = arith.constant 0 : i32
    return %arg0, %c0_i32 : i32, i32
  }
  func.func @transform_1(%arg0: i32) -> (i32, i32) {
    %c0_i32 = arith.constant 0 : i32
    %c0_i32_0 = arith.constant 0 : i32
    %c0_i32_1 = arith.constant 0 : i32
    return %c0_i32, %c0_i32_0 : i32, i32
  }
  func.func @transform_2(%arg0: i32) -> (i32, i32) {
    %c0_i32 = arith.constant 0 : i32
    %c0_i32_0 = arith.constant 0 : i32
    %c0_i32_1 = arith.constant 0 : i32
    return %c0_i32, %c0_i32_0 : i32, i32
  }
  func.func @transform_3(%arg0: i32) -> (i32, i32) {
    %c0_i32 = arith.constant 0 : i32
    %c0_i32_0 = arith.constant 0 : i32
    return %arg0, %c0_i32 : i32, i32
  }
}

</mosaic_0001>

<llo_original>
// kernel: tpu_custom_call.1
$region0: #{tpu_custom_call.1}
  #allocation0 [shape = 'u32[]', space=smem, size = 0x4, offset = 0x4, fixed_abs, tag = 'smem constant byte address 0x4 - core index']
  #allocation1 [shape = 'u32[144,128]{1,0:T(1,128)}', space=vmem, size = 0x12000, scoped, tag = 'internal scratch']
  %s0 = inlined_call_operand.hbm [shape: bf16[16,32], index: 0, kind: input, shape index: {}]
  %s1 = inlined_call_operand.hbm [shape: bf16[32,32], index: 1, kind: input, shape index: {}]
  %s2 = inlined_call_operand.hbm [shape: f32[1,32], index: 2, kind: input, shape index: {}]
  %s3 = inlined_call_operand.hbm [shape: bf16[16,32], index: 3, kind: output, shape index: {}]
  %s4 = sld [smem:[#allocation0]]
  $region34: #{tpu_custom_call.1} parent=0
    _
  %s6 = ssub.s32 1, %s4
  %s7 = scalar_select 0, %s6, %s4
  $region1: #{tpu_custom_call.1} parent=0
    #allocation2 [shape = 'u8[4096]{0}', space=vmem, size = 0x1000, scoped, tag = 'input window, operand 0, single buffered']
    #allocation3 [shape = 's32[1]{0}', space=sflag, size = 0x4, scoped, tag = 'scoped memory for tpu_custom_call.1']
    #allocation4 [shape = 's32[1]{0}', space=sflag, size = 0x4, scoped, tag = 'scoped memory for tpu_custom_call.1']
    #allocation5 [shape = 'u8[8192]{0}', space=vmem, size = 0x2000, scoped, tag = 'input window, operand 1, single buffered']
    #allocation6 [shape = 's32[1]{0}', space=sflag, size = 0x4, scoped, tag = 'scoped memory for tpu_custom_call.1']
    #allocation7 [shape = 'u8[512]{0}', space=vmem, size = 0x400, scoped, tag = 'input window, operand 2, single buffered']
    #allocation8 [shape = 'u8[4096]{0}', space=vmem, size = 0x1000, scoped, tag = 'output window, operand 0, single buffered']
    %8 = vsyncpa [#allocation3], 0
    %9 = vsyncpa [#allocation6], 0
    %10 = vsyncpa [#allocation4], 0
    // Predicated region
    $region2: #{tpu_custom_call.1} parent=1 // pred_check
      _
    $region3: #{tpu_custom_call.1} parent=1 // pred_check_branch
      %12 = sbr.rel (0) target = $region5
    $region4: #{tpu_custom_call.1} parent=1 // pred_region
      %s14 = ssub.s32 128, 128
      %15 = vsyncadd [#allocation3], %s14
      %s16 = sshll.u32 [#allocation2], 4
      %s17 = int_to_ptr.vmem [resolvable:$true] %s16
      %22 = dma.hbm_to_vmem [thread:$0]  %s0, 128, %s17, [#allocation3], 64, 64, 4
    $region5: #{tpu_custom_call.1} parent=1 // pred_fallthru
      _
    // Predicated region
    $region6: #{tpu_custom_call.1} parent=1 // pred_check
      _
    $region7: #{tpu_custom_call.1} parent=1 // pred_check_branch
      %24 = sbr.rel (0) target = $region9
    $region8: #{tpu_custom_call.1} parent=1 // pred_region
      %s26 = ssub.s32 256, 256
      %27 = vsyncadd [#allocation6], %s26
      %s28 = sshll.u32 [#allocation5], 4
      %s29 = int_to_ptr.vmem [resolvable:$true] %s28
      %34 = dma.hbm_to_vmem [thread:$0]  %s1, 256, %s29, [#allocation6], 64, 64, 4
    $region9: #{tpu_custom_call.1} parent=1 // pred_fallthru
      _
    // Predicated region
    $region10: #{tpu_custom_call.1} parent=1 // pred_check
      _
    $region11: #{tpu_custom_call.1} parent=1 // pred_check_branch
      %36 = sbr.rel (0) target = $region13
    $region12: #{tpu_custom_call.1} parent=1 // pred_region
      %s38 = ssub.s32 16, 16
      %39 = vsyncadd [#allocation6], %s38
      %s41 = sshll.u32 [#allocation7], 4
      %s42 = int_to_ptr.vmem [resolvable:$true] %s41
      %44 = dma.hbm_to_vmem [thread:$0]  %s2, 16, %s42, [#allocation6]
    $region13: #{tpu_custom_call.1} parent=1 // pred_fallthru
      _
    // Predicated region
    $region14: #{tpu_custom_call.1} parent=1 // pred_check
      _
    $region15: #{tpu_custom_call.1} parent=1 // pred_check_branch
      %46 = sbr.rel (0) target = $region17
    $region16: #{tpu_custom_call.1} parent=1 // pred_region
      %47 = dma.done [#allocation3], 128
    $region17: #{tpu_custom_call.1} parent=1 // pred_fallthru
      _
    // Predicated region
    $region18: #{tpu_custom_call.1} parent=1 // pred_check
      _
    $region19: #{tpu_custom_call.1} parent=1 // pred_check_branch
      %49 = sbr.rel (0) target = $region21
    $region20: #{tpu_custom_call.1} parent=1 // pred_region
      %50 = dma.done [#allocation6], 256
    $region21: #{tpu_custom_call.1} parent=1 // pred_fallthru
      _
    // Predicated region
    $region22: #{tpu_custom_call.1} parent=1 // pred_check
      _
    $region23: #{tpu_custom_call.1} parent=1 // pred_check_branch
      %52 = sbr.rel (0) target = $region25
    $region24: #{tpu_custom_call.1} parent=1 // pred_region
      %53 = dma.done [#allocation6], 16
    $region25: #{tpu_custom_call.1} parent=1 // pred_fallthru
      _
    %v55 = vld [vmem:[#allocation2] sm:$0xf]
    %v56 = vld [vmem:[#allocation2 + $0x4] sm:$0xf]
    %v57 = vld [vmem:[#allocation5] sm:$0xf]
    %v58 = vld [vmem:[#allocation5 + $0x4] sm:$0xf]
    %v59 = vld [vmem:[#allocation5 + $0x8] sm:$0xf]
    %v60 = vld [vmem:[#allocation5 + $0xc] sm:$0xf]
    %v61 = vld [vmem:[#allocation7] sm:$0x1]
    %v63 = vlaneseq
    %v64 = vshrl.u32 %v63, 7
    %v65 = vsub.s32 0, %v64
    %v66 = vrot.slane %v61, %v65
    %v70 = vunpack.c.l.b16 %v55
    %v71 = vunpack.c.l.b16 %v56
    %v72 = vpack.c.b16 %v71, %v70
    %v77 = vunpack.c.l.b16 %v57
    %v78 = vunpack.c.l.b16 %v58
    %v79 = vunpack.c.l.b16 %v59
    %v80 = vunpack.c.l.b16 %v60
    %v81 = vpack.c.b16 %v78, %v77
    %v82 = vpack.c.b16 %v80, %v79
    %vm85 = vcmask 261120
    %v87 = vsel %vm85, %v72, 0
    %89 = vmatprep.subr.bf16.mxu0 0
    %90 = vmatpush1.bf16.msra.mxu0 %v81
    %91 = vmatprep.subr.bf16.mxu0 0
    %92 = vmatpush1.bf16.msra.mxu0 %v82
    %93 = vmatprep.subr.bf16.mxu0 0
    %94 = vmatpush1.bf16.msra.mxu0 0
    %95 = vmatprep.subr.bf16.mxu0 0
    %96 = vmatpush1.bf16.msra.mxu0 0
    %97 = vmatprep.subr.bf16.mxu0 0
    %98 = vmatpush1.bf16.msra.mxu0 0
    %99 = vmatprep.subr.bf16.mxu0 0
    %100 = vmatpush1.bf16.msra.mxu0 0
    %101 = vmatprep.subr.bf16.mxu0 0
    %102 = vmatpush1.bf16.msra.mxu0 0
    %103 = vmatprep.subr.bf16.mxu0 0
    %104 = vmatpush1.bf16.msra.mxu0 0
    %105 = vmatprep.subr.bf16.mxu0 0
    %106 = vmatpush1.bf16.msra.mxu0 0
    %107 = vmatprep.subr.bf16.mxu0 0
    %108 = vmatpush1.bf16.msra.mxu0 0
    %109 = vmatprep.subr.bf16.mxu0 0
    %110 = vmatpush1.bf16.msra.mxu0 0
    %111 = vmatprep.subr.bf16.mxu0 0
    %112 = vmatpush1.bf16.msra.mxu0 0
    %113 = vmatprep.subr.bf16.mxu0 0
    %114 = vmatpush1.bf16.msra.mxu0 0
    %115 = vmatprep.subr.bf16.mxu0 0
    %116 = vmatpush1.bf16.msra.mxu0 0
    %117 = vmatprep.subr.bf16.mxu0 0
    %118 = vmatpush1.bf16.msra.mxu0 0
    %119 = vmatprep.subr.bf16.mxu0 0
    %120 = vmatpush1.bf16.msra.mxu0 0
    %121 = vmatprep.mubr.bf16.mxu0 0
    %122 = vmatmul.mubr.bf16.gmra.mrb[0].mxu0 %v87
    %v123 = vpop.f32.mrb[0].mxu0
    %v124 = vadd.f32 %v66, %v123
    %v125 = vpop.f32.mrb[0].mxu0
    %v126 = vpop.f32.mrb[0].mxu0
    %v127 = vadd.f32 %v66, %v126
    %v128 = vpop.f32.mrb[0].mxu0
    %129 = vdwg.mxu0
    %v130 = vpack.c.bf16 %v127, %v124
    %v132 = vunpack.c.l.b16 %v130
    %v133 = vunpack.c.h.b16 %v130
    %v134 = vpack.c.b16 %v132, %v132
    %v135 = vpack.c.b16 %v133, %v133
    %vm138 = vcmask 257024
    %139 = vst.msk [vmem:[#allocation8] sm:$0xf] %vm138, %v134
    %140 = vst.msk [vmem:[#allocation8 + $0x4] sm:$0xf] %vm138, %v135
    // Predicated region
    $region26: #{tpu_custom_call.1} parent=1 // pred_check
      _
    $region27: #{tpu_custom_call.1} parent=1 // pred_check_branch
      %142 = sbr.rel (0) target = $region29
    $region28: #{tpu_custom_call.1} parent=1 // pred_region
      %s144 = ssub.s32 128, 128
      %145 = vsyncadd [#allocation4], %s144
      %s146 = sshll.u32 [#allocation8], 4
      %s147 = int_to_ptr.vmem [resolvable:$true] %s146
      %152 = dma.vmem_to_hbm [thread:$0]  %s147, 128, %s3, [#allocation4], 64, 64, 4
    $region29: #{tpu_custom_call.1} parent=1 // pred_fallthru
      _
    // Predicated region
    $region30: #{tpu_custom_call.1} parent=1 // pred_check
      _
    $region31: #{tpu_custom_call.1} parent=1 // pred_check_branch
      %154 = sbr.rel (0) target = $region33
    $region32: #{tpu_custom_call.1} parent=1 // pred_region
      %155 = dma.done [#allocation4], 128
    $region33: #{tpu_custom_call.1} parent=1 // pred_fallthru
      _
    %156 = vsyncpa [#allocation3], 1
    %157 = vsyncpa [#allocation6], 1
    %158 = vsyncpa [#allocation4], 1

</llo_original>
